<compile_context>
chip_gen: v6e
topology: v6e:2x2x1
jax: 0.10.0
libtpu: 0.0.40
codegen_flags: <defaults>
</compile_context>

<pallas_src>
import functools

import jax
import jax.numpy as jnp
from jax.experimental import pallas as pl
from jax.experimental.pallas import tpu as pltpu


def _ce_loss_kernel(s_ref, t_ref, out_ref, *, total_rows, tm, mask_tail):
    """One grid step: partial CE sum over a (tm, D) row tile -> out_ref[0, 0]."""
    s = s_ref[...].astype(jnp.float32)   # (tm, D)
    t = t_ref[...].astype(jnp.float32)   # (tm, D)

    # -sum(t * log_softmax(s)) == lse(s) * sum(t) - sum(t * s)
    m = jnp.max(s, axis=-1, keepdims=True)                                   # (tm, 1)
    lse = m + jnp.log(jnp.sum(jnp.exp(s - m), axis=-1, keepdims=True))       # (tm, 1)
    t_sum = jnp.sum(t, axis=-1, keepdims=True)                               # (tm, 1)
    ts_sum = jnp.sum(t * s, axis=-1, keepdims=True)                          # (tm, 1)
    row_loss = lse * t_sum - ts_sum                                          # (tm, 1)

    if mask_tail:
        # Zero out rows past the true batch size in the (padded) last tile.
        row_ids = pl.program_id(0) * tm + jax.lax.broadcasted_iota(
            jnp.int32, (tm, 1), 0)
        row_loss = jnp.where(row_ids < total_rows, row_loss, 0.0)

    out_ref[0, 0] = jnp.sum(row_loss)


def ce_loss(student_output, teacher_output, *, tm=None,
            tile_vmem_budget_bytes=24 << 20):
    """Pallas CELoss: mean over rows of -sum(teacher * log_softmax(student), -1)."""
    assert student_output.shape == teacher_output.shape
    assert student_output.ndim == 2, "layout: [batch, num_classes]"
    N, D = student_output.shape

    # Keep the class axis lane-dense (multiple of 128). Padding the student with
    # a very negative value and the teacher with zeros leaves the loss unchanged.
    D_pad = pl.cdiv(D, 128) * 128
    if D_pad != D:
        pad = D_pad - D
        neg = jnp.asarray(-1e30, dtype=student_output.dtype)
        student_output = jnp.pad(student_output, ((0, 0), (0, pad)),
                                 constant_values=neg)
        teacher_output = jnp.pad(teacher_output, ((0, 0), (0, pad)))
        D = D_pad

    # Bytes of VMEM per tiled row: 2 inputs x 2 pipeline buffers each.
    bytes_per_row = 2 * D * (jnp.dtype(student_output.dtype).itemsize
                             + jnp.dtype(teacher_output.dtype).itemsize)

    # Row tile: as large as the (generation-safe) VMEM budget allows, rounded to
    # a sublane multiple, and never larger than the (rounded-up) batch.
    if tm is None:
        tm = (tile_vmem_budget_bytes // bytes_per_row) // 8 * 8
    tm = int(max(8, (min(tm, pl.cdiv(N, 8) * 8) // 8) * 8))

    grid = pl.cdiv(N, tm)
    mask_tail = (N % tm) != 0

    # Raise the scoped VMEM limit enough for the chosen tile (with headroom),
    # while staying comfortably under v7x's 64 MiB physical VMEM.
    vmem_limit = int(min(max(tm * bytes_per_row + (2 << 20), 32 << 20), 48 << 20))

    kernel = functools.partial(_ce_loss_kernel, total_rows=N, tm=tm,
                               mask_tail=mask_tail)

    partials = pl.pallas_call(
        kernel,
        out_shape=jax.ShapeDtypeStruct((grid, 1), jnp.float32),
        grid_spec=pltpu.PrefetchScalarGridSpec(
            num_scalar_prefetch=0,
            grid=(grid,),
            in_specs=[
                pl.BlockSpec((tm, D), lambda i: (i, 0)),
                pl.BlockSpec((tm, D), lambda i: (i, 0)),
            ],
            out_specs=pl.BlockSpec(
                (1, 1), lambda i: (i, 0), memory_space=pltpu.SMEM
            ),
        ),
        compiler_params=pltpu.CompilerParams(
            dimension_semantics=("parallel",),  # independent per-tile partials
            vmem_limit_bytes=vmem_limit,
        ),
    )(student_output, teacher_output)

    # Tiny final reduction (grid partial sums) + mean normalization in JAX.
    return jnp.sum(partials) / jnp.float32(N)


def _reference(student_output, teacher_output):
    logp = jax.nn.log_softmax(student_output.astype(jnp.float32), axis=-1)
    loss = -jnp.sum(teacher_output.astype(jnp.float32) * logp, axis=-1)
    return jnp.mean(loss)


if __name__ == "__main__":
    key = jax.random.PRNGKey(0)
    k1, k2 = jax.random.split(key)

    # Small, lane-aligned case: batch=16 rows, 128 classes.
    N, D = 16, 128
    student = jax.random.normal(k1, (N, D), dtype=jnp.float32)
    teacher = jax.nn.softmax(jax.random.normal(k2, (N, D), dtype=jnp.float32),
                             axis=-1)

    loss = jax.block_until_ready(ce_loss(student, teacher))
    ref = _reference(student, teacher)
    assert jnp.allclose(loss, ref, rtol=1e-5, atol=1e-5), (loss, ref)

    # Ragged case: batch not a multiple of the tile, classes not a multiple of 128.
    k3, k4 = jax.random.split(k1)
    N2, D2 = 12, 96
    student2 = jax.random.normal(k3, (N2, D2), dtype=jnp.float32)
    teacher2 = jax.nn.softmax(jax.random.normal(k4, (N2, D2), dtype=jnp.float32),
                              axis=-1)
    loss2 = jax.block_until_ready(ce_loss(student2, teacher2))
    ref2 = _reference(student2, teacher2)
    assert jnp.allclose(loss2, ref2, rtol=1e-5, atol=1e-5), (loss2, ref2)

    print("KERNEL_OK")
</pallas_src>

<mosaic_0001>
module attributes {stable_mosaic.version = 11 : i64} {
  func.func @_ce_loss_kernel(%arg0: i32, %arg1: memref<16x128xf32, #tpu.memory_space<vmem>>, %arg2: memref<16x128xf32, #tpu.memory_space<vmem>>, %arg3: memref<1x1xf32, #tpu.memory_space<smem>>) attributes {dimension_semantics = [#tpu.dimension_semantics<parallel>], iteration_bounds = array<i64: 1>, scalar_prefetch = 0 : i64, scratch_operands = 0 : i64, tpu.core_type = #tpu.core_type<tc>, window_params = [{transform_indices = @transform_0, window_bounds = array<i64: 16, 128>}, {transform_indices = @transform_1, window_bounds = array<i64: 16, 128>}, {transform_indices = @transform_2, window_bounds = array<i64: 1, 1>}]} {
    %c0 = arith.constant 0 : index
    %c0_0 = arith.constant 0 : index
    %0 = vector.load %arg1[%c0, %c0_0] : memref<16x128xf32, #tpu.memory_space<vmem>>, vector<16x128xf32>
    %c0_1 = arith.constant 0 : index
    %c0_2 = arith.constant 0 : index
    %1 = vector.load %arg2[%c0_1, %c0_2] : memref<16x128xf32, #tpu.memory_space<vmem>>, vector<16x128xf32>
    %cst = arith.constant dense<0xFF800000> : vector<16xf32>
    %2 = vector.multi_reduction <maximumf>, %0, %cst [1] : vector<16x128xf32> to vector<16xf32>
    %3 = vector.shape_cast %2 : vector<16xf32> to vector<16x1xf32>
    %4 = vector.broadcast %3 : vector<16x1xf32> to vector<16x128xf32>
    %5 = arith.subf %0, %4 : vector<16x128xf32>
    %6 = math.exp %5 : vector<16x128xf32>
    %cst_3 = arith.constant dense<0.000000e+00> : vector<16xf32>
    %7 = vector.multi_reduction <add>, %6, %cst_3 [1] : vector<16x128xf32> to vector<16xf32>
    %8 = vector.shape_cast %7 : vector<16xf32> to vector<16x1xf32>
    %9 = math.log %8 : vector<16x1xf32>
    %10 = arith.addf %3, %9 : vector<16x1xf32>
    %cst_4 = arith.constant dense<0.000000e+00> : vector<16xf32>
    %11 = vector.multi_reduction <add>, %1, %cst_4 [1] : vector<16x128xf32> to vector<16xf32>
    %12 = vector.shape_cast %11 : vector<16xf32> to vector<16x1xf32>
    %13 = arith.mulf %1, %0 : vector<16x128xf32>
    %cst_5 = arith.constant dense<0.000000e+00> : vector<16xf32>
    %14 = vector.multi_reduction <add>, %13, %cst_5 [1] : vector<16x128xf32> to vector<16xf32>
    %15 = vector.shape_cast %14 : vector<16xf32> to vector<16x1xf32>
    %16 = arith.mulf %10, %12 : vector<16x1xf32>
    %17 = arith.subf %16, %15 : vector<16x1xf32>
    %18 = vector.shape_cast %17 : vector<16x1xf32> to vector<1x16x1xf32>
    %cst_6 = arith.constant dense<0.000000e+00> : vector<1xf32>
    %19 = vector.multi_reduction <add>, %18, %cst_6 [1, 2] : vector<1x16x1xf32> to vector<1xf32>
    %20 = vector.shape_cast %19 : vector<1xf32> to vector<1x1x1xf32>
    %21 = vector.extract %20[0, 0, 0] : f32 from vector<1x1x1xf32>
    %c0_7 = arith.constant 0 : index
    %c0_8 = arith.constant 0 : index
    %22 = memref.load %arg3[%c0_7, %c0_8] : memref<1x1xf32, #tpu.memory_space<smem>>
    memref.store %21, %arg3[%c0_7, %c0_8] : memref<1x1xf32, #tpu.memory_space<smem>>
    return
  }
  func.func @transform_0(%arg0: i32) -> (i32, i32) {
    %c0_i32 = arith.constant 0 : i32
    %c0_i32_0 = arith.constant 0 : i32
    return %arg0, %c0_i32 : i32, i32
  }
  func.func @transform_1(%arg0: i32) -> (i32, i32) {
    %c0_i32 = arith.constant 0 : i32
    %c0_i32_0 = arith.constant 0 : i32
    return %arg0, %c0_i32 : i32, i32
  }
  func.func @transform_2(%arg0: i32) -> (i32, i32) {
    %c0_i32 = arith.constant 0 : i32
    %c0_i32_0 = arith.constant 0 : i32
    return %arg0, %c0_i32 : i32, i32
  }
}

</mosaic_0001>

<llo_original>
// kernel: tpu_custom_call.1
$region0: #{tpu_custom_call.1}
  #allocation0 [shape = 'u32[]', space=smem, size = 0x4, offset = 0x4, fixed_abs, tag = 'smem constant byte address 0x4 - core index']
  #allocation1 [shape = 'u32[144,128]{1,0:T(1,128)}', space=vmem, size = 0x12000, scoped, tag = 'internal scratch']
  %s0 = inlined_call_operand.hbm [shape: f32[16,128], index: 0, kind: input, shape index: {}]
  %s1 = inlined_call_operand.hbm [shape: f32[16,128], index: 1, kind: input, shape index: {}]
  %s2 = inlined_call_operand.hbm [shape: f32[1,1], index: 2, kind: output, shape index: {}]
  %s3 = sld [smem:[#allocation0]]
  $region26: #{tpu_custom_call.1} parent=0
    _
  %s5 = ssub.s32 1, %s3
  %s6 = scalar_select 0, %s5, %s3
  $region1: #{tpu_custom_call.1} parent=0
    #allocation2 [shape = 'u8[8192]{0}', space=vmem, size = 0x2000, scoped, tag = 'input window, operand 0, single buffered']
    #allocation3 [shape = 's32[1]{0}', space=sflag, size = 0x4, scoped, tag = 'scoped memory for tpu_custom_call.1']
    #allocation4 [shape = 's32[1]{0}', space=sflag, size = 0x4, scoped, tag = 'scoped memory for tpu_custom_call.1']
    #allocation5 [shape = 'u8[8192]{0}', space=vmem, size = 0x2000, scoped, tag = 'input window, operand 1, single buffered']
    #allocation6 [shape = 's32[1]{0}', space=sflag, size = 0x4, scoped, tag = 'scoped memory for tpu_custom_call.1']
    #allocation7 [shape = 'u8[512]{0}', space=smem, size = 0x200, scoped, tag = 'output window, operand 0, single buffered']
    %7 = vsyncpa [#allocation3], 0
    %8 = vsyncpa [#allocation6], 0
    %9 = vsyncpa [#allocation4], 0
    // Predicated region
    $region2: #{tpu_custom_call.1} parent=1 // pred_check
      _
    $region3: #{tpu_custom_call.1} parent=1 // pred_check_branch
      %11 = sbr.rel (0) target = $region5
    $region4: #{tpu_custom_call.1} parent=1 // pred_region
      %s13 = ssub.s32 256, 256
      %14 = vsyncadd [#allocation3], %s13
      %s15 = sshll.u32 [#allocation2], 4
      %s16 = int_to_ptr.vmem [resolvable:$true] %s15
      %21 = dma.hbm_to_vmem [thread:$0]  %s0, 256, %s16, [#allocation3], 128, 128, 8
    $region5: #{tpu_custom_call.1} parent=1 // pred_fallthru
      _
    // Predicated region
    $region6: #{tpu_custom_call.1} parent=1 // pred_check
      _
    $region7: #{tpu_custom_call.1} parent=1 // pred_check_branch
      %23 = sbr.rel (0) target = $region9
    $region8: #{tpu_custom_call.1} parent=1 // pred_region
      %s25 = ssub.s32 256, 256
      %26 = vsyncadd [#allocation6], %s25
      %s27 = sshll.u32 [#allocation5], 4
      %s28 = int_to_ptr.vmem [resolvable:$true] %s27
      %33 = dma.hbm_to_vmem [thread:$0]  %s1, 256, %s28, [#allocation6], 128, 128, 8
    $region9: #{tpu_custom_call.1} parent=1 // pred_fallthru
      _
    // Predicated region
    $region10: #{tpu_custom_call.1} parent=1 // pred_check
      _
    $region11: #{tpu_custom_call.1} parent=1 // pred_check_branch
      %35 = sbr.rel (0) target = $region13
    $region12: #{tpu_custom_call.1} parent=1 // pred_region
      %36 = dma.done [#allocation3], 256
    $region13: #{tpu_custom_call.1} parent=1 // pred_fallthru
      _
    // Predicated region
    $region14: #{tpu_custom_call.1} parent=1 // pred_check
      _
    $region15: #{tpu_custom_call.1} parent=1 // pred_check_branch
      %38 = sbr.rel (0) target = $region17
    $region16: #{tpu_custom_call.1} parent=1 // pred_region
      %39 = dma.done [#allocation6], 256
    $region17: #{tpu_custom_call.1} parent=1 // pred_fallthru
      _
    %v40 = vld [vmem:[#allocation2] sm:$0xff]
    %v41 = vld [vmem:[#allocation2 + $0x8] sm:$0xff]
    %v42 = vld [vmem:[#allocation5] sm:$0xff]
    %v43 = vld [vmem:[#allocation5 + $0x8] sm:$0xff]
    %44 = vmax.xlane.f32.xlu0 %v40
    %v45 = vpop.xlane.xlu0 %44
    %46 = vmax.xlane.f32.xlu0 %v41
    %v47 = vpop.xlane.xlu0 %46
    %v48 = vsub.f32 %v40, %v45
    %v49 = vsub.f32 %v41, %v47
    %v50 = vmul.f32 %v48, 1.442695
    %v51 = vpow.pop %v50
    %v52 = vmul.f32 %v49, 1.442695
    %v53 = vpow.pop %v52
    %54 = vadd.xlane.f32.xlu0 %v51
    %v55 = vpop.xlane.xlu0 %54
    %56 = vadd.xlane.f32.xlu0 %v53
    %v57 = vpop.xlane.xlu0 %56
    %v58 = vlog2.pop %v55
    %v59 = vmul.f32 %v58, 0.6931472
    %v60 = vlog2.pop %v57
    %v61 = vmul.f32 %v60, 0.6931472
    %v62 = vadd.f32 %v45, %v59
    %v63 = vadd.f32 %v47, %v61
    %64 = vadd.xlane.f32.xlu0 %v42
    %v65 = vpop.xlane.xlu0 %64
    %66 = vadd.xlane.f32.xlu0 %v43
    %v67 = vpop.xlane.xlu0 %66
    %v68 = vmul.f32 %v42, %v40
    %v69 = vmul.f32 %v43, %v41
    %70 = vadd.xlane.f32.xlu0 %v68
    %v71 = vpop.xlane.xlu0 %70
    %72 = vadd.xlane.f32.xlu0 %v69
    %v73 = vpop.xlane.xlu0 %72
    %v74 = vmul.f32 %v62, %v65
    %v75 = vmul.f32 %v63, %v67
    %v76 = vsub.f32 %v74, %v71
    %v77 = vsub.f32 %v75, %v73
    %vm78 = vcmask 7168
    %v79 = vsel %vm78, %v76, 0.0
    %v80 = vsel %vm78, %v77, 0.0
    %v81 = vadd.f32 %v79, %v80
    %82 = vadd.xlane.f32.xlu0 %v81
    %v83 = vpop.xlane.xlu0 %82
    %v84 = vrot.slane %v83, 4
    %v85 = vadd.f32 %v83, %v84
    %v86 = vrot.slane %v85, 2
    %v87 = vadd.f32 %v85, %v86
    %v88 = vrot.slane %v87, 1
    %v89 = vadd.f32 %v87, %v88
    %s90 = vtos %v89
    %s91 = scalar_lea.smem [#allocation7], 0
    %92 = sst [smem:[%s91]] %s90
    // Predicated region
    $region18: #{tpu_custom_call.1} parent=1 // pred_check
      _
    $region19: #{tpu_custom_call.1} parent=1 // pred_check_branch
      %94 = sbr.rel (0) target = $region21
    $region20: #{tpu_custom_call.1} parent=1 // pred_region
      %s96 = ssub.s32 16, 16
      %97 = vsyncadd [#allocation4], %s96
      %100 = dma.smem_to_hbm [#allocation7], 16, %s2, [#allocation4]
    $region21: #{tpu_custom_call.1} parent=1 // pred_fallthru
      _
    // Predicated region
    $region22: #{tpu_custom_call.1} parent=1 // pred_check
      _
    $region23: #{tpu_custom_call.1} parent=1 // pred_check_branch
      %102 = sbr.rel (0) target = $region25
    $region24: #{tpu_custom_call.1} parent=1 // pred_region
      %103 = dma.done [#allocation4], 16
    $region25: #{tpu_custom_call.1} parent=1 // pred_fallthru
      _
    %104 = sfence
    %105 = vsyncpa [#allocation3], 1
    %106 = vsyncpa [#allocation6], 1
    %107 = vsyncpa [#allocation4], 1

</llo_original>
